<compile_context>
chip_gen: v7x
topology: tpu7x:2x2x1
jax: 0.10.0
libtpu: 0.0.40
codegen_flags: <defaults>
</compile_context>

<pallas_src>
import functools

import jax
import jax.numpy as jnp
from jax import lax
from jax.experimental import pallas as pl
from jax.experimental.pallas import tpu as pltpu

LANE = 128  # TPU vreg lane width; all feature dims are zero-padded to this.


def _round_up(x, m):
    return (x + m - 1) // m * m


# ----------------------------- kernel helpers ----------------------------- #

def _masked_layernorm(h, gamma, beta, n_real, eps=1e-5):
    """LayerNorm over the first `n_real` lanes of the 128-wide padded axis.

    Padded lanes of `h` are exactly zero on entry; gamma/beta are zero-padded,
    so padded lanes stay exactly zero on exit.
    """
    lane = lax.broadcasted_iota(jnp.int32, (1, h.shape[-1]), 1)
    mask = (lane < n_real).astype(h.dtype)
    inv_n = jnp.float32(1.0 / n_real)
    mean = jnp.sum(h, axis=-1, keepdims=True) * inv_n
    centered = (h - mean) * mask
    var = jnp.sum(centered * centered, axis=-1, keepdims=True) * inv_n
    return centered * lax.rsqrt(var + eps) * gamma + beta


def _gelu(x):
    # Exact (erf) GELU, matching torch.nn.functional.gelu default.
    return 0.5 * x * (1.0 + lax.erf(x * jnp.float32(0.7071067811865476)))


# ------------------------------ Pallas kernels ----------------------------- #

def _stage1_kernel(x_ref, w0_ref, b0_ref, g0_ref, be0_ref, w1_ref,
                   h_ref, hw_ref, *, num_hid):
    """Layer 0 (Linear -> LN -> GELU -> dropout(id)) + pre-multiply H @ W1."""
    x = x_ref[...]
    h = jnp.dot(x, w0_ref[...], preferred_element_type=jnp.float32) + b0_ref[...]
    h = _gelu(_masked_layernorm(h, g0_ref[...], be0_ref[...], num_hid))
    h_ref[...] = h
    # HW is emitted in bf16: it is the RHS of the dominant A @ HW contraction.
    hw_ref[...] = jnp.dot(h, w1_ref[...],
                          preferred_element_type=jnp.float32).astype(jnp.bfloat16)


def _stage2_kernel(a_ref, hw_ref, h_ref, b1_ref, g1_ref, be1_ref,
                   w2_ref, b2_ref, out_ref, *, num_hid):
    """Layer 1 (GCNConv -> LN -> GELU -> dropout(id) + residual) + final Linear."""
    # Dominant O(N^2) contraction: bf16 inputs, f32 MXU accumulation.
    s = jnp.dot(a_ref[...], hw_ref[...],
                preferred_element_type=jnp.float32) + b1_ref[...]
    h2 = _gelu(_masked_layernorm(s, g1_ref[...], be1_ref[...], num_hid))
    h = h2 + h_ref[...]  # residual (dropout is identity in eval mode)
    out_ref[...] = jnp.dot(h, w2_ref[...],
                           preferred_element_type=jnp.float32) + b2_ref[...]


# ------------------------------- host wrapper ------------------------------ #

def _full_spec(shape):
    # Whole-array block, constant across the row grid (weights / biases).
    return pl.BlockSpec(shape, lambda i: (0,) * len(shape))


def gcn_lr_forward(x, a_norm, params, *, block_rows=256):
    """Run the fused GCN_lr forward pass (two Pallas kernels)."""
    (w0, b0, g0, be0, w1, b1, g1, be1, w2, b2) = params
    n, _ = x.shape
    num_hid = w0.shape[1]
    out_c = w2.shape[1]

    block_rows = max(8, _round_up(min(block_rows, _round_up(n, 8)), 8))
    n_pad = _round_up(n, block_rows)
    grid = (n_pad // block_rows,)

    def pad2(m, rows, cols):
        m = jnp.asarray(m, jnp.float32)
        return jnp.zeros((rows, cols), jnp.float32).at[:m.shape[0], :m.shape[1]].set(m)

    x_p = pad2(x, n_pad, LANE)
    a_p = pad2(a_norm, n_pad, n_pad).astype(jnp.bfloat16)  # streamed as bf16
    w0_p, w1_p, w2_p = (pad2(w, LANE, LANE) for w in (w0, w1, w2))
    b0_p, g0_p, be0_p = (pad2(v, 1, LANE) for v in (b0, g0, be0))
    b1_p, g1_p, be1_p = (pad2(v, 1, LANE) for v in (b1, g1, be1))
    b2_p = pad2(b2, 1, LANE)

    row_tile = lambda: pl.BlockSpec((block_rows, LANE), lambda i: (i, 0))
    cparams = pltpu.CompilerParams(
        dimension_semantics=("parallel",),
        vmem_limit_bytes=64 << 20,
    )

    # ---- Stage 1: per-row-tile H and HW = H @ W1 ---- #
    h_full, hw_full = pl.pallas_call(
        functools.partial(_stage1_kernel, num_hid=num_hid),
        grid=grid,
        out_shape=(jax.ShapeDtypeStruct((n_pad, LANE), jnp.float32),
                   jax.ShapeDtypeStruct((n_pad, LANE), jnp.bfloat16)),
        in_specs=[
            row_tile(),                 # x row tile
            _full_spec((LANE, LANE)),   # w0
            _full_spec((1, LANE)),      # b0
            _full_spec((1, LANE)),      # ln0 gamma
            _full_spec((1, LANE)),      # ln0 beta
            _full_spec((LANE, LANE)),   # w1
        ],
        out_specs=(row_tile(), row_tile()),
        compiler_params=cparams,
    )(x_p, w0_p, b0_p, g0_p, be0_p, w1_p)

    # ---- Stage 2: stream A row-slabs; HW stays VMEM-resident ---- #
    out_pad = pl.pallas_call(
        functools.partial(_stage2_kernel, num_hid=num_hid),
        grid=grid,
        out_shape=jax.ShapeDtypeStruct((n_pad, LANE), jnp.float32),
        in_specs=[
            pl.BlockSpec((block_rows, n_pad), lambda i: (i, 0)),  # A row slab (bf16)
            pl.BlockSpec((n_pad, LANE), lambda i: (0, 0)),        # HW (resident)
            row_tile(),                                           # H row tile (residual)
            _full_spec((1, LANE)),      # b1
            _full_spec((1, LANE)),      # ln1 gamma
            _full_spec((1, LANE)),      # ln1 beta
            _full_spec((LANE, LANE)),   # w2
            _full_spec((1, LANE)),      # b2
        ],
        out_specs=row_tile(),
        compiler_params=cparams,
    )(a_p, hw_full, h_full, b1_p, g1_p, be1_p, w2_p, b2_p)

    return out_pad[:n, :out_c]


# ------------------------------- JAX glue --------------------------------- #

def gcn_norm_dense(edge_index, edge_weight, num_nodes):
    """Dense D^-1/2 (A + I) D^-1/2 with A[dst, src] = edge_weight (GCNConv)."""
    src, dst = edge_index[0], edge_index[1]
    if edge_weight is None:
        edge_weight = jnp.ones(src.shape[0], jnp.float32)
    loop = jnp.arange(num_nodes)
    src = jnp.concatenate([src, loop])
    dst = jnp.concatenate([dst, loop])
    w = jnp.concatenate([edge_weight.astype(jnp.float32),
                         jnp.ones(num_nodes, jnp.float32)])
    a = jnp.zeros((num_nodes, num_nodes), jnp.float32).at[dst, src].add(w)
    deg = a.sum(axis=1)
    dinv = jnp.where(deg > 0, 1.0 / jnp.sqrt(deg), 0.0)
    return dinv[:, None] * a * dinv[None, :]


def init_params(key, in_channels, num_hid, out_channels):
    ks = jax.random.split(key, 6)

    def unif(k, shape, fan_in):
        bound = 1.0 / jnp.sqrt(fan_in)
        return jax.random.uniform(k, shape, jnp.float32, -bound, bound)

    w0 = unif(ks[0], (in_channels, num_hid), in_channels)
    b0 = unif(ks[1], (1, num_hid), in_channels)
    g0 = jnp.ones((1, num_hid), jnp.float32)
    be0 = jnp.zeros((1, num_hid), jnp.float32)
    w1 = unif(ks[2], (num_hid, num_hid), num_hid)
    b1 = unif(ks[3], (1, num_hid), num_hid)
    g1 = jnp.ones((1, num_hid), jnp.float32)
    be1 = jnp.zeros((1, num_hid), jnp.float32)
    w2 = unif(ks[4], (num_hid, out_channels), num_hid)
    b2 = unif(ks[5], (1, out_channels), num_hid)
    return (w0, b0, g0, be0, w1, b1, g1, be1, w2, b2)


def reference_forward(x, a_norm, params, *, bf16_adjacency=False):
    """Pure-JAX reference (mirrors the PyTorch forward in eval mode).

    With bf16_adjacency=True, the A @ (H W1) contraction uses bf16 inputs with
    f32 accumulation, matching the kernel's MXU precision choice exactly.
    """
    (w0, b0, g0, be0, w1, b1, g1, be1, w2, b2) = params

    def ln(h, g, b, eps=1e-5):
        m = h.mean(-1, keepdims=True)
        v = ((h - m) ** 2).mean(-1, keepdims=True)
        return (h - m) / jnp.sqrt(v + eps) * g + b

    gelu = functools.partial(jax.nn.gelu, approximate=False)

    h = gelu(ln(x @ w0 + b0, g0, be0))
    x_in = h
    hw = h @ w1
    if bf16_adjacency:
        s = jnp.dot(a_norm.astype(jnp.bfloat16), hw.astype(jnp.bfloat16),
                    preferred_element_type=jnp.float32)
    else:
        s = a_norm @ hw
    h2 = gelu(ln(s + b1, g1, be1))
    h = h2 + x_in
    return h @ w2 + b2


if __name__ == "__main__":
    key = jax.random.PRNGKey(0)
    k_x, k_e, k_w, k_p = jax.random.split(key, 4)

    num_nodes, in_channels, num_hid, out_channels = 64, 8, 32, 8
    num_edges = 256

    x = jax.random.normal(k_x, (num_nodes, in_channels), jnp.float32)
    edge_index = jax.random.randint(k_e, (2, num_edges), 0, num_nodes, jnp.int32)
    edge_weight = jax.random.uniform(k_w, (num_edges,), jnp.float32, 0.5, 1.5)

    params = init_params(k_p, in_channels, num_hid, out_channels)
    a_norm = gcn_norm_dense(edge_index, edge_weight, num_nodes)

    # block_rows=32 -> grid of 2 row tiles, exercising the pipelined path.
    out = gcn_lr_forward(x, a_norm, params, block_rows=32)
    out = jax.block_until_ready(out)
    assert out.shape == (num_nodes, out_channels)

    # Tight check against a reference with matched bf16 adjacency precision.
    ref_match = reference_forward(x, a_norm, params, bf16_adjacency=True)
    assert jnp.allclose(out, ref_match, rtol=5e-3, atol=5e-3), \
        "mismatch vs precision-matched reference"

    # Loose sanity bound vs the pure-f32 reference (bf16 adjacency drift).
    ref_f32 = reference_forward(x, a_norm, params, bf16_adjacency=False)
    assert jnp.allclose(out, ref_f32, rtol=1e-1, atol=1e-1), \
        "bf16 adjacency drift exceeds sanity bound"

    print("KERNEL_OK")
</pallas_src>

<mosaic_0001>
module attributes {stable_mosaic.version = 11 : i64} {
  func.func @_stage1_kernel(%arg0: i32, %arg1: memref<32x128xf32, #tpu.memory_space<vmem>>, %arg2: memref<128x128xf32, #tpu.memory_space<vmem>>, %arg3: memref<1x128xf32, #tpu.memory_space<vmem>>, %arg4: memref<1x128xf32, #tpu.memory_space<vmem>>, %arg5: memref<1x128xf32, #tpu.memory_space<vmem>>, %arg6: memref<128x128xf32, #tpu.memory_space<vmem>>, %arg7: memref<32x128xf32, #tpu.memory_space<vmem>>, %arg8: memref<32x128xbf16, #tpu.memory_space<vmem>>) attributes {dimension_semantics = [#tpu.dimension_semantics<parallel>], iteration_bounds = array<i64: 2>, scalar_prefetch = 0 : i64, scratch_operands = 0 : i64, tpu.core_type = #tpu.core_type<tc>, window_params = [{transform_indices = @transform_0, window_bounds = array<i64: 32, 128>}, {pipeline_mode = #tpu.pipeline_mode<synchronous>, transform_indices = @transform_1, window_bounds = array<i64: 128, 128>}, {pipeline_mode = #tpu.pipeline_mode<synchronous>, transform_indices = @transform_2, window_bounds = array<i64: 1, 128>}, {pipeline_mode = #tpu.pipeline_mode<synchronous>, transform_indices = @transform_3, window_bounds = array<i64: 1, 128>}, {pipeline_mode = #tpu.pipeline_mode<synchronous>, transform_indices = @transform_4, window_bounds = array<i64: 1, 128>}, {pipeline_mode = #tpu.pipeline_mode<synchronous>, transform_indices = @transform_5, window_bounds = array<i64: 128, 128>}, {transform_indices = @transform_6, window_bounds = array<i64: 32, 128>}, {transform_indices = @transform_7, window_bounds = array<i64: 32, 128>}]} {
    %c0 = arith.constant 0 : index
    %c0_0 = arith.constant 0 : index
    %0 = vector.load %arg1[%c0, %c0_0] : memref<32x128xf32, #tpu.memory_space<vmem>>, vector<32x128xf32>
    %c0_1 = arith.constant 0 : index
    %c0_2 = arith.constant 0 : index
    %1 = vector.load %arg2[%c0_1, %c0_2] : memref<128x128xf32, #tpu.memory_space<vmem>>, vector<128x128xf32>
    %cst = arith.constant dense<0.000000e+00> : vector<32x128xf32>
    %2 = tpu.matmul %0, %1, %cst {dimension_numbers = #tpu.dot_dimension_numbers<[1], [0], [0], [1], [0, 0, 1, 1], [], []>} : vector<32x128xf32>, vector<128x128xf32>, vector<32x128xf32> -> vector<32x128xf32>
    %c0_3 = arith.constant 0 : index
    %c0_4 = arith.constant 0 : index
    %3 = vector.load %arg3[%c0_3, %c0_4] : memref<1x128xf32, #tpu.memory_space<vmem>>, vector<1x128xf32>
    %4 = vector.broadcast %3 : vector<1x128xf32> to vector<32x128xf32>
    %5 = arith.addf %2, %4 : vector<32x128xf32>
    %c0_5 = arith.constant 0 : index
    %c0_6 = arith.constant 0 : index
    %6 = vector.load %arg4[%c0_5, %c0_6] : memref<1x128xf32, #tpu.memory_space<vmem>>, vector<1x128xf32>
    %c0_7 = arith.constant 0 : index
    %c0_8 = arith.constant 0 : index
    %7 = vector.load %arg5[%c0_7, %c0_8] : memref<1x128xf32, #tpu.memory_space<vmem>>, vector<1x128xf32>
    %8 = tpu.iota {dimensions = array<i32: 1>} : vector<1x128xi32>
    %c32_i32 = arith.constant 32 : i32
    %9 = vector.broadcast %c32_i32 : i32 to vector<1x128xi32>
    %10 = arith.cmpi slt, %8, %9 : vector<1x128xi32>
    %11 = arith.extui %10 : vector<1x128xi1> to vector<1x128xi32>
    %12 = arith.sitofp %11 : vector<1x128xi32> to vector<1x128xf32>
    %cst_9 = arith.constant dense<0.000000e+00> : vector<32xf32>
    %13 = vector.multi_reduction <add>, %5, %cst_9 [1] : vector<32x128xf32> to vector<32xf32>
    %14 = vector.shape_cast %13 : vector<32xf32> to vector<32x1xf32>
    %cst_10 = arith.constant 3.125000e-02 : f32
    %15 = vector.broadcast %cst_10 : f32 to vector<32x1xf32>
    %16 = arith.mulf %14, %15 : vector<32x1xf32>
    %17 = vector.broadcast %16 : vector<32x1xf32> to vector<32x128xf32>
    %18 = arith.subf %5, %17 : vector<32x128xf32>
    %19 = vector.broadcast %12 : vector<1x128xf32> to vector<32x128xf32>
    %20 = arith.mulf %18, %19 : vector<32x128xf32>
    %21 = arith.mulf %20, %20 : vector<32x128xf32>
    %cst_11 = arith.constant dense<0.000000e+00> : vector<32xf32>
    %22 = vector.multi_reduction <add>, %21, %cst_11 [1] : vector<32x128xf32> to vector<32xf32>
    %23 = vector.shape_cast %22 : vector<32xf32> to vector<32x1xf32>
    %cst_12 = arith.constant 3.125000e-02 : f32
    %24 = vector.broadcast %cst_12 : f32 to vector<32x1xf32>
    %25 = arith.mulf %23, %24 : vector<32x1xf32>
    %cst_13 = arith.constant 9.99999974E-6 : f32
    %26 = vector.broadcast %cst_13 : f32 to vector<32x1xf32>
    %27 = arith.addf %25, %26 : vector<32x1xf32>
    %28 = math.rsqrt %27 : vector<32x1xf32>
    %29 = vector.broadcast %28 : vector<32x1xf32> to vector<32x128xf32>
    %30 = arith.mulf %20, %29 : vector<32x128xf32>
    %31 = vector.broadcast %6 : vector<1x128xf32> to vector<32x128xf32>
    %32 = arith.mulf %30, %31 : vector<32x128xf32>
    %33 = vector.broadcast %7 : vector<1x128xf32> to vector<32x128xf32>
    %34 = arith.addf %32, %33 : vector<32x128xf32>
    %cst_14 = arith.constant 5.000000e-01 : f32
    %35 = vector.broadcast %cst_14 : f32 to vector<32x128xf32>
    %36 = arith.mulf %35, %34 : vector<32x128xf32>
    %cst_15 = arith.constant 0.707106769 : f32
    %37 = vector.broadcast %cst_15 : f32 to vector<32x128xf32>
    %38 = arith.mulf %34, %37 : vector<32x128xf32>
    %39 = math.erf %38 : vector<32x128xf32>
    %cst_16 = arith.constant 1.000000e+00 : f32
    %40 = vector.broadcast %cst_16 : f32 to vector<32x128xf32>
    %41 = arith.addf %40, %39 : vector<32x128xf32>
    %42 = arith.mulf %36, %41 : vector<32x128xf32>
    %c0_17 = arith.constant 0 : index
    %c0_18 = arith.constant 0 : index
    %43 = vector.load %arg7[%c0_17, %c0_18] : memref<32x128xf32, #tpu.memory_space<vmem>>, vector<32x128xf32>
    tpu.vector_store %arg7[%c0_17, %c0_18], %42 {strides = array<i32>} : memref<32x128xf32, #tpu.memory_space<vmem>>, vector<32x128xf32>,
    %c0_19 = arith.constant 0 : index
    %c0_20 = arith.constant 0 : index
    %44 = vector.load %arg6[%c0_19, %c0_20] : memref<128x128xf32, #tpu.memory_space<vmem>>, vector<128x128xf32>
    %cst_21 = arith.constant dense<0.000000e+00> : vector<32x128xf32>
    %45 = tpu.matmul %42, %44, %cst_21 {dimension_numbers = #tpu.dot_dimension_numbers<[1], [0], [0], [1], [0, 0, 1, 1], [], []>} : vector<32x128xf32>, vector<128x128xf32>, vector<32x128xf32> -> vector<32x128xf32>
    %46 = arith.truncf %45 : vector<32x128xf32> to vector<32x128xbf16>
    %c0_22 = arith.constant 0 : index
    %c0_23 = arith.constant 0 : index
    %47 = vector.load %arg8[%c0_22, %c0_23] : memref<32x128xbf16, #tpu.memory_space<vmem>>, vector<32x128xbf16>
    tpu.vector_store %arg8[%c0_22, %c0_23], %46 {strides = array<i32>} : memref<32x128xbf16, #tpu.memory_space<vmem>>, vector<32x128xbf16>,
    return
  }
  func.func @transform_0(%arg0: i32) -> (i32, i32) {
    %c0_i32 = arith.constant 0 : i32
    %c0_i32_0 = arith.constant 0 : i32
    return %arg0, %c0_i32 : i32, i32
  }
  func.func @transform_1(%arg0: i32) -> (i32, i32) {
    %c0_i32 = arith.constant 0 : i32
    %c0_i32_0 = arith.constant 0 : i32
    %c0_i32_1 = arith.constant 0 : i32
    return %c0_i32, %c0_i32_0 : i32, i32
  }
  func.func @transform_2(%arg0: i32) -> (i32, i32) {
    %c0_i32 = arith.constant 0 : i32
    %c0_i32_0 = arith.constant 0 : i32
    %c0_i32_1 = arith.constant 0 : i32
    return %c0_i32, %c0_i32_0 : i32, i32
  }
  func.func @transform_3(%arg0: i32) -> (i32, i32) {
    %c0_i32 = arith.constant 0 : i32
    %c0_i32_0 = arith.constant 0 : i32
    %c0_i32_1 = arith.constant 0 : i32
    return %c0_i32, %c0_i32_0 : i32, i32
  }
  func.func @transform_4(%arg0: i32) -> (i32, i32) {
    %c0_i32 = arith.constant 0 : i32
    %c0_i32_0 = arith.constant 0 : i32
    %c0_i32_1 = arith.constant 0 : i32
    return %c0_i32, %c0_i32_0 : i32, i32
  }
  func.func @transform_5(%arg0: i32) -> (i32, i32) {
    %c0_i32 = arith.constant 0 : i32
    %c0_i32_0 = arith.constant 0 : i32
    %c0_i32_1 = arith.constant 0 : i32
    return %c0_i32, %c0_i32_0 : i32, i32
  }
  func.func @transform_6(%arg0: i32) -> (i32, i32) {
    %c0_i32 = arith.constant 0 : i32
    %c0_i32_0 = arith.constant 0 : i32
    return %arg0, %c0_i32 : i32, i32
  }
  func.func @transform_7(%arg0: i32) -> (i32, i32) {
    %c0_i32 = arith.constant 0 : i32
    %c0_i32_0 = arith.constant 0 : i32
    return %arg0, %c0_i32 : i32, i32
  }
}

</mosaic_0001>

<llo_original>
// kernel: tpu_custom_call.1
$region0: #{tpu_custom_call.1}
  #allocation0 [shape = 'u32[]', space=smem, size = 0x4, offset = 0x4, fixed_abs, tag = 'smem constant byte address 0x4 - core index']
  #allocation1 [shape = 'u32[144,128]{1,0:T(1,128)}', space=vmem, size = 0x12000, scoped, tag = 'internal scratch']
  %s0 = inlined_call_operand.hbm [shape: f32[64,128], index: 0, kind: input, shape index: {}]
  %s1 = inlined_call_operand.hbm [shape: f32[128,128], index: 1, kind: input, shape index: {}]
  %s2 = inlined_call_operand.hbm [shape: f32[1,128], index: 2, kind: input, shape index: {}]
  %s3 = inlined_call_operand.hbm [shape: f32[1,128], index: 3, kind: input, shape index: {}]
  %s4 = inlined_call_operand.hbm [shape: f32[1,128], index: 4, kind: input, shape index: {}]
  %s5 = inlined_call_operand.hbm [shape: f32[128,128], index: 5, kind: input, shape index: {}]
  %s6 = inlined_call_operand.hbm [shape: f32[64,128], index: 6, kind: output, shape index: {0}]
  %s7 = inlined_call_operand.hbm [shape: bf16[64,128], index: 7, kind: output, shape index: {1}]
  %8 = xla_tuple %s6, %s7
  %s9 = sld [smem:[#allocation0]]
  $region89: #{tpu_custom_call.1} parent=0
    _
  %s11 = ssub.s32 1, %s9
  %s12 = scalar_select 0, %s11, %s9
  $region1: #{tpu_custom_call.1} parent=0
    #allocation2 [shape = 'u8[32768]{0}', space=vmem, size = 0x8000, scoped, tag = 'input window, operand 0']
    #allocation3 [shape = 's32[2]{0}', space=sflag, size = 0x8, scoped, tag = 'scoped memory for tpu_custom_call.1']
    #allocation4 [shape = 's32[2]{0}', space=sflag, size = 0x8, scoped, tag = 'scoped memory for tpu_custom_call.1']
    #allocation5 [shape = 'u8[65536]{0}', space=vmem, size = 0x10000, scoped, tag = 'input window, operand 1, single buffered']
    #allocation6 [shape = 's32[1]{0}', space=sflag, size = 0x4, scoped, tag = 'scoped memory for tpu_custom_call.1']
    #allocation7 [shape = 'u8[512]{0}', space=vmem, size = 0x400, scoped, tag = 'input window, operand 2, single buffered']
    #allocation8 [shape = 'u8[512]{0}', space=vmem, size = 0x400, scoped, tag = 'input window, operand 3, single buffered']
    #allocation9 [shape = 's32[1]{0}', space=sflag, size = 0x4, scoped, tag = 'scoped memory for tpu_custom_call.1']
    #allocation10 [shape = 'u8[512]{0}', space=vmem, size = 0x400, scoped, tag = 'input window, operand 4, single buffered']
    #allocation11 [shape = 'u8[65536]{0}', space=vmem, size = 0x10000, scoped, tag = 'input window, operand 5, single buffered']
    #allocation12 [shape = 's32[1]{0}', space=sflag, size = 0x4, scoped, tag = 'scoped memory for tpu_custom_call.1']
    #allocation13 [shape = 'u8[32768]{0}', space=vmem, size = 0x8000, scoped, tag = 'output window, operand 0']
    #allocation14 [shape = 'u8[16384]{0}', space=vmem, size = 0x4000, scoped, tag = 'output window, operand 1']
    #allocation15 [shape = 's32[2]{0}', space=sflag, size = 0x8, scoped, tag = 'scoped memory for tpu_custom_call.1']
    %13 = vsyncpa [#allocation3], 0
    %s14 = scalar_lea.sflag [#allocation3], 1
    %15 = vsyncpa %s14, 0
    %16 = vsyncpa [#allocation6], 0
    %17 = vsyncpa [#allocation9], 0
    %18 = vsyncpa [#allocation12], 0
    %19 = vsyncpa [#allocation4], 0
    %s20 = scalar_lea.sflag [#allocation4], 1
    %21 = vsyncpa %s20, 0
    %22 = vsyncpa [#allocation15], 0
    %s23 = scalar_lea.sflag [#allocation15], 1
    %24 = vsyncpa %s23, 0
    loop: start=0, step=1, limit=4
    $region2: #{tpu_custom_call.1} parent=1 // loop_pre_header
      _
    $region3: #{tpu_custom_call.1} parent=1 // loop_header
      %s26 = sphi 0, %s30
      %p27 = scmp.ge.s32.totalorder %s26, 4
      %s36 = sphi 0, %s38
      %s39 = sphi 0, %s36
      %s40 = sphi 0, %s39
      %s56 = sphi 0, %s40
      %s60 = sphi 0, %s60
      %s62 = sphi 0, %s60
      %s63 = sphi 0, %s62
      %s77 = sphi 0, %s63
      %s81 = sphi 0, %s81
      %s83 = sphi 0, %s81
      %s84 = sphi 0, %s83
      %s98 = sphi 0, %s84
      %s102 = sphi 0, %s102
      %s104 = sphi 0, %s102
      %s105 = sphi 0, %s104
      %s119 = sphi 0, %s105
      %s123 = sphi 0, %s123
      %s125 = sphi 0, %s123
      %s126 = sphi 0, %s125
      %s140 = sphi 0, %s126
      %s144 = sphi 0, %s144
      %s146 = sphi 0, %s144
      %s147 = sphi 0, %s146
      %s161 = sphi 0, %s147
      %s167 = sphi 0, %s169
      %s170 = sphi 0, %s167
      %s171 = sphi 0, %s170
      %s187 = sphi 0, %s171
      %s193 = sphi 0, %s195
      %s196 = sphi 0, %s193
      %s197 = sphi 0, %s196
      %s213 = sphi 0, %s197
    $region4: #{tpu_custom_call.1} parent=1 // loop_header_branch
      %29 = sbr.rel (%p27) target = $region8
    $region5: #{tpu_custom_call.1} parent=1 // loop_body
      %s31 = ssub.s32 %s26, 1
      %s32 = ssub.s32 %s26, 2
      %s33 = sadd.s32 %s26, 1
      %s34 = ssub.s32 %s26, %s33
      %p35 = scmp.eq.s32.totalorder %s34, 0
      %s37 = sadd.s32 %s36, 1
      %s38 = scalar_select %p35, %s36, %s37
      %p41 = pneg %p35
      %p42 = scmp.eq.s32.totalorder %s26, 1
      %p43 = por %p41, %p42
      %p44 = scmp.ne.s32.totalorder %s36, %s39
      %p45 = scmp.eq.s32.totalorder %s26, 0
      %p46 = por %p44, %p45
      %p47 = scmp.ne.s32.totalorder %s36, %s39
      %p48 = scmp.eq.s32.totalorder %s31, 1
      %p49 = por %p47, %p48
      %p50 = scmp.ne.s32.totalorder %s39, %s40
      %p51 = scmp.eq.s32.totalorder %s31, 0
      %p52 = por %p50, %p51
      %p53 = scmp.ne.s32.totalorder %s39, %s40
      %p54 = scmp.eq.s32.totalorder %s32, 1
      %p55 = por %p53, %p54
      %p57 = scmp.ne.s32.totalorder %s40, %s56
      %p58 = scmp.eq.s32.totalorder %s32, 0
      %p59 = por %p57, %p58
      %s61 = sadd.s32 %s60, 1
      %p64 = scmp.eq.s32.totalorder %s26, 1
      %p65 = scmp.ne.s32.totalorder %s60, %s62
      %p66 = scmp.eq.s32.totalorder %s26, 0
      %p67 = por %p65, %p66
      %p68 = scmp.ne.s32.totalorder %s60, %s62
      %p69 = scmp.eq.s32.totalorder %s31, 1
      %p70 = por %p68, %p69
      %p71 = scmp.ne.s32.totalorder %s62, %s63
      %p72 = scmp.eq.s32.totalorder %s31, 0
      %p73 = por %p71, %p72
      %p74 = scmp.ne.s32.totalorder %s62, %s63
      %p75 = scmp.eq.s32.totalorder %s32, 1
      %p76 = por %p74, %p75
      %p78 = scmp.ne.s32.totalorder %s63, %s77
      %p79 = scmp.eq.s32.totalorder %s32, 0
      %p80 = por %p78, %p79
      %s82 = sadd.s32 %s81, 1
      %p85 = scmp.eq.s32.totalorder %s26, 1
      %p86 = scmp.ne.s32.totalorder %s81, %s83
      %p87 = scmp.eq.s32.totalorder %s26, 0
      %p88 = por %p86, %p87
      %p89 = scmp.ne.s32.totalorder %s81, %s83
      %p90 = scmp.eq.s32.totalorder %s31, 1
      %p91 = por %p89, %p90
      %p92 = scmp.ne.s32.totalorder %s83, %s84
      %p93 = scmp.eq.s32.totalorder %s31, 0
      %p94 = por %p92, %p93
      %p95 = scmp.ne.s32.totalorder %s83, %s84
      %p96 = scmp.eq.s32.totalorder %s32, 1
      %p97 = por %p95, %p96
      %p99 = scmp.ne.s32.totalorder %s84, %s98
      %p100 = scmp.eq.s32.totalorder %s32, 0
      %p101 = por %p99, %p100
      %s103 = sadd.s32 %s102, 1
      %p106 = scmp.eq.s32.totalorder %s26, 1
      %p107 = scmp.ne.s32.totalorder %s102, %s104
      %p108 = scmp.eq.s32.totalorder %s26, 0
      %p109 = por %p107, %p108
      %p110 = scmp.ne.s32.totalorder %s102, %s104
      %p111 = scmp.eq.s32.totalorder %s31, 1
      %p112 = por %p110, %p111
      %p113 = scmp.ne.s32.totalorder %s104, %s105
      %p114 = scmp.eq.s32.totalorder %s31, 0
      %p115 = por %p113, %p114
      %p116 = scmp.ne.s32.totalorder %s104, %s105
      %p117 = scmp.eq.s32.totalorder %s32, 1
      %p118 = por %p116, %p117
      %p120 = scmp.ne.s32.totalorder %s105, %s119
      %p121 = scmp.eq.s32.totalorder %s32, 0
      %p122 = por %p120, %p121
      %s124 = sadd.s32 %s123, 1
      %p127 = scmp.eq.s32.totalorder %s26, 1
      %p128 = scmp.ne.s32.totalorder %s123, %s125
      %p129 = scmp.eq.s32.totalorder %s26, 0
      %p130 = por %p128, %p129
      %p131 = scmp.ne.s32.totalorder %s123, %s125
      %p132 = scmp.eq.s32.totalorder %s31, 1
      %p133 = por %p131, %p132
      %p134 = scmp.ne.s32.totalorder %s125, %s126
      %p135 = scmp.eq.s32.totalorder %s31, 0
      %p136 = por %p134, %p135
      %p137 = scmp.ne.s32.totalorder %s125, %s126
      %p138 = scmp.eq.s32.totalorder %s32, 1
      %p139 = por %p137, %p138
      %p141 = scmp.ne.s32.totalorder %s126, %s140
      %p142 = scmp.eq.s32.totalorder %s32, 0
      %p143 = por %p141, %p142
      %s145 = sadd.s32 %s144, 1
      %p148 = scmp.eq.s32.totalorder %s26, 1
      %p149 = scmp.ne.s32.totalorder %s144, %s146
      %p150 = scmp.eq.s32.totalorder %s26, 0
      %p151 = por %p149, %p150
      %p152 = scmp.ne.s32.totalorder %s144, %s146
      %p153 = scmp.eq.s32.totalorder %s31, 1
      %p154 = por %p152, %p153
      %p155 = scmp.ne.s32.totalorder %s146, %s147
      %p156 = scmp.eq.s32.totalorder %s31, 0
      %p157 = por %p155, %p156
      %p158 = scmp.ne.s32.totalorder %s146, %s147
      %p159 = scmp.eq.s32.totalorder %s32, 1
      %p160 = por %p158, %p159
      %p162 = scmp.ne.s32.totalorder %s147, %s161
      %p163 = scmp.eq.s32.totalorder %s32, 0
      %p164 = por %p162, %p163
      %s165 = ssub.s32 %s26, %s33
      %p166 = scmp.eq.s32.totalorder %s165, 0
      %s168 = sadd.s32 %s167, 1
      %s169 = scalar_select %p166, %s167, %s168
      %p172 = pneg %p166
      %p173 = scmp.eq.s32.totalorder %s26, 1
      %p174 = por %p172, %p173
      %p175 = scmp.ne.s32.totalorder %s167, %s170
      %p176 = scmp.eq.s32.totalorder %s26, 0
      %p177 = por %p175, %p176
      %p178 = scmp.ne.s32.totalorder %s167, %s170
      %p179 = scmp.eq.s32.totalorder %s31, 1
      %p180 = por %p178, %p179
      %p181 = scmp.ne.s32.totalorder %s170, %s171
      %p182 = scmp.eq.s32.totalorder %s31, 0
      %p183 = por %p181, %p182
      %p184 = scmp.ne.s32.totalorder %s170, %s171
      %p185 = scmp.eq.s32.totalorder %s32, 1
      %p186 = por %p184, %p185
      %p188 = scmp.ne.s32.totalorder %s171, %s187
      %p189 = scmp.eq.s32.totalorder %s32, 0
      %p190 = por %p188, %p189
      %s191 = ssub.s32 %s26, %s33
      %p192 = scmp.eq.s32.totalorder %s191, 0
      %s194 = sadd.s32 %s193, 1
      %s195 = scalar_select %p192, %s193, %s194
      %p198 = pneg %p192
      %p199 = scmp.eq.s32.totalorder %s26, 1
      %p200 = por %p198, %p199
      %p201 = scmp.ne.s32.totalorder %s193, %s196
      %p202 = scmp.eq.s32.totalorder %s26, 0
      %p203 = por %p201, %p202
      %p204 = scmp.ne.s32.totalorder %s193, %s196
      %p205 = scmp.eq.s32.totalorder %s31, 1
      %p206 = por %p204, %p205
      %p207 = scmp.ne.s32.totalorder %s196, %s197
      %p208 = scmp.eq.s32.totalorder %s31, 0
      %p209 = por %p207, %p208
      %p210 = scmp.ne.s32.totalorder %s196, %s197
      %p211 = scmp.eq.s32.totalorder %s32, 1
      %p212 = por %p210, %p211
      %p214 = scmp.ne.s32.totalorder %s197, %s213
      %p215 = scmp.eq.s32.totalorder %s32, 0
      %p216 = por %p214, %p215
      %p217 = scmp.le.s32.totalorder 1, %s26
      %p218 = scmp.lt.s32.totalorder %s26, 3
      %p219 = pnand %p217, %p218
      %p220 = pneg %p219
      // Predicated region
      $region9: #{tpu_custom_call.1} parent=5 // pred_check
        _
      $region10: #{tpu_custom_call.1} parent=5 // pred_check_branch
        %222 = sbr.rel (%p219) target = $region12
      $region11: #{tpu_custom_call.1} parent=5 // pred_region
        %s223 = ssub.s32 %s26, 1
        // Predicated region
        $region13: #{tpu_custom_call.1} parent=11 // pred_check
          %p224 = pneg %p73
        $region14: #{tpu_custom_call.1} parent=11 // pred_check_branch
          %226 = sbr.rel (%p224) target = $region16
        $region15: #{tpu_custom_call.1} parent=11 // pred_region
          %s228 = ssub.s32 2048, 2048
          %229 = vsyncadd [#allocation6], %s228
          %s230 = sshll.u32 [#allocation5], 4
          %s231 = int_to_ptr.vmem [resolvable:$true] %s230
          %236 = dma.hbm_to_vmem [thread:$0]  %s1, 2048, %s231, [#allocation6], 128, 128, 8
        $region16: #{tpu_custom_call.1} parent=11 // pred_fallthru
          _
        // Predicated region
        $region17: #{tpu_custom_call.1} parent=11 // pred_check
          %p237 = pneg %p94
        $region18: #{tpu_custom_call.1} parent=11 // pred_check_branch
          %239 = sbr.rel (%p237) target = $region20
        $region19: #{tpu_custom_call.1} parent=11 // pred_region
          %s241 = ssub.s32 16, 16
          %242 = vsyncadd [#allocation6], %s241
          %s244 = sshll.u32 [#allocation7], 4
          %s245 = int_to_ptr.vmem [resolvable:$true] %s244
          %247 = dma.hbm_to_vmem [thread:$0]  %s2, 16, %s245, [#allocation6]
        $region20: #{tpu_custom_call.1} parent=11 // pred_fallthru
          _
        // Predicated region
        $region21: #{tpu_custom_call.1} parent=11 // pred_check
          %p248 = pneg %p115
        $region22: #{tpu_custom_call.1} parent=11 // pred_check_branch
          %250 = sbr.rel (%p248) target = $region24
        $region23: #{tpu_custom_call.1} parent=11 // pred_region
          %s252 = ssub.s32 16, 16
          %253 = vsyncadd [#allocation9], %s252
          %s255 = sshll.u32 [#allocation8], 4
          %s256 = int_to_ptr.vmem [resolvable:$true] %s255
          %258 = dma.hbm_to_vmem [thread:$0]  %s3, 16, %s256, [#allocation9]
        $region24: #{tpu_custom_call.1} parent=11 // pred_fallthru
          _
        // Predicated region
        $region25: #{tpu_custom_call.1} parent=11 // pred_check
          %p259 = pneg %p136
        $region26: #{tpu_custom_call.1} parent=11 // pred_check_branch
          %261 = sbr.rel (%p259) target = $region28
        $region27: #{tpu_custom_call.1} parent=11 // pred_region
          %s263 = ssub.s32 16, 16
          %264 = vsyncadd [#allocation9], %s263
          %s266 = sshll.u32 [#allocation10], 4
          %s267 = int_to_ptr.vmem [resolvable:$true] %s266
          %269 = dma.hbm_to_vmem [thread:$0]  %s4, 16, %s267, [#allocation9]
        $region28: #{tpu_custom_call.1} parent=11 // pred_fallthru
          _
        // Predicated region
        $region29: #{tpu_custom_call.1} parent=11 // pred_check
          %p270 = pneg %p157
        $region30: #{tpu_custom_call.1} parent=11 // pred_check_branch
          %272 = sbr.rel (%p270) target = $region32
        $region31: #{tpu_custom_call.1} parent=11 // pred_region
          %s274 = ssub.s32 2048, 2048
          %275 = vsyncadd [#allocation12], %s274
          %s276 = sshll.u32 [#allocation11], 4
          %s277 = int_to_ptr.vmem [resolvable:$true] %s276
          %282 = dma.hbm_to_vmem [thread:$0]  %s5, 2048, %s277, [#allocation12], 128, 128, 8
        $region32: #{tpu_custom_call.1} parent=11 // pred_fallthru
          _
      $region12: #{tpu_custom_call.1} parent=5 // pred_fallthru
        _
      %p283 = scmp.lt.s32.totalorder %s26, 2
      // Predicated region
      $region33: #{tpu_custom_call.1} parent=5 // pred_check
        %p284 = pneg %p283
      $region34: #{tpu_custom_call.1} parent=5 // pred_check_branch
        %286 = sbr.rel (%p284) target = $region36
      $region35: #{tpu_custom_call.1} parent=5 // pred_region
        // Predicated region
        $region37: #{tpu_custom_call.1} parent=35 // pred_check
          %p287 = pneg %p46
        $region38: #{tpu_custom_call.1} parent=35 // pred_check_branch
          %289 = sbr.rel (%p287) target = $region40
        $region39: #{tpu_custom_call.1} parent=35 // pred_region
          %s290 = sand.u32 %s36, 1
          %s291 = scalar_lea.sflag [#allocation3], %s290
          %s292 = sand.u32 %s36, 1
          %s293 = smul.addr %s292, 32
          %s294 = scalar_lea.vmem [#allocation2], %s293
          %s295 = smul.u32 4, %s26
          %s297 = ssub.s32 512, 512
          %298 = vsyncadd %s291, %s297
          %s299 = smul.addr %s295, 128
          %s300 = scalar_lea.hbm %s0, %s299
          %s301 = sshll.u32 %s294, 4
          %s302 = int_to_ptr.vmem [resolvable:$true] %s301
          %307 = dma.hbm_to_vmem [thread:$0]  %s300, 512, %s302, %s291, 128, 128, 8
        $region40: #{tpu_custom_call.1} parent=35 // pred_fallthru
          _
      $region36: #{tpu_custom_call.1} parent=5 // pred_fallthru
        _
      %p308 = scmp.le.s32.totalorder 1, %s26
      %p309 = scmp.lt.s32.totalorder %s26, 3
      %p310 = pnand %p308, %p309
      %p311 = pneg %p310
      // Predicated region
      $region41: #{tpu_custom_call.1} parent=5 // pred_check
        _
      $region42: #{tpu_custom_call.1} parent=5 // pred_check_branch
        %313 = sbr.rel (%p310) target = $region44
      $region43: #{tpu_custom_call.1} parent=5 // pred_region
        %s314 = ssub.s32 %s26, 1
        %s315 = sand.u32 %s39, 1
        %s316 = scalar_lea.sflag [#allocation3], %s315
        %s317 = sand.u32 %s39, 1
        %s318 = smul.addr %s317, 32
        %s319 = scalar_lea.vmem [#allocation2], %s318
        // Predicated region
        $region45: #{tpu_custom_call.1} parent=43 // pred_check
          %p320 = pneg %p52
        $region46: #{tpu_custom_call.1} parent=43 // pred_check_branch
          %322 = sbr.rel (%p320) target = $region48
        $region47: #{tpu_custom_call.1} parent=43 // pred_region
          %323 = dma.done %s316, 512
        $region48: #{tpu_custom_call.1} parent=43 // pred_fallthru
          _
        // Predicated region
        $region49: #{tpu_custom_call.1} parent=43 // pred_check
          %p324 = pneg %p73
        $region50: #{tpu_custom_call.1} parent=43 // pred_check_branch
          %326 = sbr.rel (%p324) target = $region52
        $region51: #{tpu_custom_call.1} parent=43 // pred_region
          %327 = dma.done [#allocation6], 2048
        $region52: #{tpu_custom_call.1} parent=43 // pred_fallthru
          _
        // Predicated region
        $region53: #{tpu_custom_call.1} parent=43 // pred_check
          %p328 = pneg %p94
        $region54: #{tpu_custom_call.1} parent=43 // pred_check_branch
          %330 = sbr.rel (%p328) target = $region56
        $region55: #{tpu_custom_call.1} parent=43 // pred_region
          %331 = dma.done [#allocation6], 16
        $region56: #{tpu_custom_call.1} parent=43 // pred_fallthru
          _
        // Predicated region
        $region57: #{tpu_custom_call.1} parent=43 // pred_check
          %p332 = pneg %p115
        $region58: #{tpu_custom_call.1} parent=43 // pred_check_branch
          %334 = sbr.rel (%p332) target = $region60
        $region59: #{tpu_custom_call.1} parent=43 // pred_region
          %335 = dma.done [#allocation9], 16
        $region60: #{tpu_custom_call.1} parent=43 // pred_fallthru
          _
        // Predicated region
        $region61: #{tpu_custom_call.1} parent=43 // pred_check
          %p336 = pneg %p136
        $region62: #{tpu_custom_call.1} parent=43 // pred_check_branch
          %338 = sbr.rel (%p336) target = $region64
        $region63: #{tpu_custom_call.1} parent=43 // pred_region
          %339 = dma.done [#allocation9], 16
        $region64: #{tpu_custom_call.1} parent=43 // pred_fallthru
          _
        // Predicated region
        $region65: #{tpu_custom_call.1} parent=43 // pred_check
          %p340 = pneg %p157
        $region66: #{tpu_custom_call.1} parent=43 // pred_check_branch
          %342 = sbr.rel (%p340) target = $region68
        $region67: #{tpu_custom_call.1} parent=43 // pred_region
          %343 = dma.done [#allocation12], 2048
        $region68: #{tpu_custom_call.1} parent=43 // pred_fallthru
          _
        %s344 = sand.u32 %s39, 1
        %s345 = scalar_lea.sflag [#allocation3], %s344
        %s346 = sand.u32 %s39, 1
        %s347 = smul.addr %s346, 32
        %s348 = scalar_lea.vmem [#allocation2], %s347
        %p349 = pneg %p52
        %p350 = pneg %p49
        %p351 = pneg %p73
        %p352 = pneg %p70
        %p353 = pneg %p94
        %p354 = pneg %p91
        %p355 = pneg %p115
        %p356 = pneg %p112
        %p357 = pneg %p136
        %p358 = pneg %p133
        %p359 = pneg %p157
        %p360 = pneg %p154
        %p361 = pneg %p183
        %p362 = pneg %p180
        %s363 = sand.u32 %s170, 1
        %s364 = scalar_lea.sflag [#allocation4], %s363
        %s365 = sand.u32 %s170, 1
        %s366 = smul.addr %s365, 32
        %s367 = scalar_lea.vmem [#allocation13], %s366
        %p368 = pneg %p209
        %p369 = pneg %p206
        %s370 = sand.u32 %s196, 1
        %s371 = scalar_lea.sflag [#allocation15], %s370
        %s372 = sand.u32 %s196, 1
        %s373 = smul.addr %s372, 16
        %s374 = scalar_lea.vmem [#allocation14], %s373
        %s375 = smul.u32 4, %s31
        %s376 = smul.u32 4, %s31
        %s377 = smul.u32 4, %s31
        %v378 = vld [vmem:[%s319] sm:$0xff]
        %v379 = vld [vmem:[%s319 + $0x8] sm:$0xff]
        %v380 = vld [vmem:[%s319 + $0x10] sm:$0xff]
        %v381 = vld [vmem:[%s319 + $0x18] sm:$0xff]
        %v382 = vld [vmem:[#allocation5] sm:$0xff]
        %v383 = vld [vmem:[#allocation5 + $0x8] sm:$0xff]
        %v384 = vld [vmem:[#allocation5 + $0x10] sm:$0xff]
        %v385 = vld [vmem:[#allocation5 + $0x18] sm:$0xff]
        %v386 = vld [vmem:[#allocation5 + $0x20] sm:$0xff]
        %v387 = vld [vmem:[#allocation5 + $0x28] sm:$0xff]
        %v388 = vld [vmem:[#allocation5 + $0x30] sm:$0xff]
        %v389 = vld [vmem:[#allocation5 + $0x38] sm:$0xff]
        %v390 = vld [vmem:[#allocation5 + $0x40] sm:$0xff]
        %v391 = vld [vmem:[#allocation5 + $0x48] sm:$0xff]
        %v392 = vld [vmem:[#allocation5 + $0x50] sm:$0xff]
        %v393 = vld [vmem:[#allocation5 + $0x58] sm:$0xff]
        %v394 = vld [vmem:[#allocation5 + $0x60] sm:$0xff]
        %v395 = vld [vmem:[#allocation5 + $0x68] sm:$0xff]
        %v396 = vld [vmem:[#allocation5 + $0x70] sm:$0xff]
        %v397 = vld [vmem:[#allocation5 + $0x78] sm:$0xff]
        %v398 = vld [vmem:[#allocation7] sm:$0x1]
        %v400 = vlaneseq
        %v401 = vshrl.u32 %v400, 7
        %v402 = vsub.s32 0, %v401
        %v403 = vrot.slane %v398, %v402
        %405 = vmatprep.subr.mxu0 0.0
        %406 = vmatpush1.msra.mxu0 %v382
        %407 = vmatprep.subr.mxu0 0.0
        %408 = vmatpush1.msra.mxu0 %v383
        %409 = vmatprep.subr.mxu0 0.0
        %410 = vmatpush1.msra.mxu0 %v384
        %411 = vmatprep.subr.mxu0 0.0
        %412 = vmatpush1.msra.mxu0 %v385
        %413 = vmatprep.subr.mxu0 0.0
        %414 = vmatpush1.msra.mxu0 %v386
        %415 = vmatprep.subr.mxu0 0.0
        %416 = vmatpush1.msra.mxu0 %v387
        %417 = vmatprep.subr.mxu0 0.0
        %418 = vmatpush1.msra.mxu0 %v388
        %419 = vmatprep.subr.mxu0 0.0
        %420 = vmatpush1.msra.mxu0 %v389
        %421 = vmatprep.subr.mxu0 0.0
        %422 = vmatpush1.msra.mxu0 %v390
        %423 = vmatprep.subr.mxu0 0.0
        %424 = vmatpush1.msra.mxu0 %v391
        %425 = vmatprep.subr.mxu0 0.0
        %426 = vmatpush1.msra.mxu0 %v392
        %427 = vmatprep.subr.mxu0 0.0
        %428 = vmatpush1.msra.mxu0 %v393
        %429 = vmatprep.subr.mxu0 0.0
        %430 = vmatpush1.msra.mxu0 %v394
        %431 = vmatprep.subr.mxu0 0.0
        %432 = vmatpush1.msra.mxu0 %v395
        %433 = vmatprep.subr.mxu0 0.0
        %434 = vmatpush1.msra.mxu0 %v396
        %435 = vmatprep.subr.mxu0 0.0
        %436 = vmatpush1.msra.mxu0 %v397
        %437 = vmatprep.subr.mxu0 0.0
        %438 = vmatpush1.msra.mxu0 0.0
        %439 = vmatprep.subr.mxu0 0.0
        %440 = vmatpush1.msra.mxu0 0.0
        %441 = vmatprep.subr.mxu0 0.0
        %442 = vmatpush1.msra.mxu0 0.0
        %443 = vmatprep.subr.mxu0 0.0
        %444 = vmatpush1.msra.mxu0 0.0
        %445 = vmatprep.subr.mxu0 0.0
        %446 = vmatpush1.msra.mxu0 0.0
        %447 = vmatprep.subr.mxu0 0.0
        %448 = vmatpush1.msra.mxu0 0.0
        %449 = vmatprep.subr.mxu0 0.0
        %450 = vmatpush1.msra.mxu0 0.0
        %451 = vmatprep.subr.mxu0 0.0
        %452 = vmatpush1.msra.mxu0 0.0
        %453 = vmatprep.subr.mxu0 0.0
        %454 = vmatpush1.msra.mxu0 0.0
        %455 = vmatprep.subr.mxu0 0.0
        %456 = vmatpush1.msra.mxu0 0.0
        %457 = vmatprep.subr.mxu0 0.0
        %458 = vmatpush1.msra.mxu0 0.0
        %459 = vmatprep.subr.mxu0 0.0
        %460 = vmatpush1.msra.mxu0 0.0
        %461 = vmatprep.subr.mxu0 0.0
        %462 = vmatpush1.msra.mxu0 0.0
        %463 = vmatprep.subr.mxu0 0.0
        %464 = vmatpush1.msra.mxu0 0.0
        %465 = vmatprep.subr.mxu0 0.0
        %466 = vmatpush1.msra.mxu0 0.0
        %467 = vmatprep.subr.mxu0 0.0
        %468 = vmatpush1.msra.mxu0 0.0
        %469 = vmatprep.mubr.f32.mxu0 0.0
        %470 = vmatmul.mubr.f32.gmra.mrb[0].mxu0 %v378
        %v471 = vpop.f32.mrb[0].mxu0
        %v472 = vadd.f32 %v403, %v471
        %v473 = vpop.f32.mrb[0].mxu0
        %474 = vmatprep.mubr.f32.mxu0 0.0
        %475 = vmatmul.mubr.f32.gmra.mrb[0].mxu0 %v379
        %v476 = vpop.f32.mrb[0].mxu0
        %v477 = vadd.f32 %v403, %v476
        %v478 = vpop.f32.mrb[0].mxu0
        %479 = vmatprep.mubr.f32.mxu0 0.0
        %480 = vmatmul.mubr.f32.gmra.mrb[0].mxu0 %v380
        %v481 = vpop.f32.mrb[0].mxu0
        %v482 = vadd.f32 %v403, %v481
        %v483 = vpop.f32.mrb[0].mxu0
        %484 = vmatprep.mubr.f32.mxu0 0.0
        %485 = vmatmul.mubr.f32.gmra.mrb[0].mxu0 %v381
        %v486 = vpop.f32.mrb[0].mxu0
        %v487 = vadd.f32 %v403, %v486
        %v488 = vpop.f32.mrb[0].mxu0
        %489 = vdwg.mxu0
        %v490 = vld [vmem:[#allocation8] sm:$0x1]
        %v491 = vld [vmem:[#allocation10] sm:$0x1]
        %v492 = vlaneseq
        %v493 = vand.u32 %v492, 127
        %vm494 = vcmp.lt.s32.totalorder %v493, 32
        %v495 = vsel %vm494, 1, 0
        %v496 = vcvt.s32.f32 %v495
        %497 = vadd.xlane.f32.xlu0 %v472
        %v498 = vpop.xlane.xlu0 %497
        %499 = vadd.xlane.f32.xlu0 %v477
        %v500 = vpop.xlane.xlu0 %499
        %501 = vadd.xlane.f32.xlu0 %v482
        %v502 = vpop.xlane.xlu0 %501
        %503 = vadd.xlane.f32.xlu0 %v487
        %v504 = vpop.xlane.xlu0 %503
        %v505 = vmul.f32 %v498, 0.03125
        %v506 = vmul.f32 %v500, 0.03125
        %v507 = vmul.f32 %v502, 0.03125
        %v508 = vmul.f32 %v504, 0.03125
        %v509 = vsub.f32 %v472, %v505
        %v510 = vsub.f32 %v477, %v506
        %v511 = vsub.f32 %v482, %v507
        %v512 = vsub.f32 %v487, %v508
        %v513 = vmul.f32 %v509, %v496
        %v514 = vmul.f32 %v510, %v496
        %v515 = vmul.f32 %v511, %v496
        %v516 = vmul.f32 %v512, %v496
        %v517 = vmul.f32 %v513, %v513
        %v518 = vmul.f32 %v514, %v514
        %v519 = vmul.f32 %v515, %v515
        %v520 = vmul.f32 %v516, %v516
        %521 = vadd.xlane.f32.xlu0 %v517
        %v522 = vpop.xlane.xlu0 %521
        %523 = vadd.xlane.f32.xlu0 %v518
        %v524 = vpop.xlane.xlu0 %523
        %525 = vadd.xlane.f32.xlu0 %v519
        %v526 = vpop.xlane.xlu0 %525
        %527 = vadd.xlane.f32.xlu0 %v520
        %v528 = vpop.xlane.xlu0 %527
        %v529 = vmul.f32 %v522, 0.03125
        %v530 = vmul.f32 %v524, 0.03125
        %v531 = vmul.f32 %v526, 0.03125
        %v532 = vmul.f32 %v528, 0.03125
        %v533 = vadd.f32 %v529, 1e-05
        %v534 = vadd.f32 %v530, 1e-05
        %v535 = vadd.f32 %v531, 1e-05
        %v536 = vadd.f32 %v532, 1e-05
        %v537 = vrsqrt.pop %v533
        %v538 = vrsqrt.pop %v534
        %v539 = vrsqrt.pop %v535
        %v540 = vrsqrt.pop %v536
        %v541 = vmul.f32 %v513, %v537
        %v542 = vmul.f32 %v514, %v538
        %v543 = vmul.f32 %v515, %v539
        %v544 = vmul.f32 %v516, %v540
        %v546 = vlaneseq
        %v547 = vshrl.u32 %v546, 7
        %v548 = vsub.s32 0, %v547
        %v549 = vrot.slane %v490, %v548
        %v551 = vmul.f32 %v541, %v549
        %v552 = vmul.f32 %v542, %v549
        %v553 = vmul.f32 %v543, %v549
        %v554 = vmul.f32 %v544, %v549
        %v556 = vlaneseq
        %v557 = vshrl.u32 %v556, 7
        %v558 = vsub.s32 0, %v557
        %v559 = vrot.slane %v491, %v558
        %v561 = vadd.f32 %v551, %v559
        %v562 = vadd.f32 %v552, %v559
        %v563 = vadd.f32 %v553, %v559
        %v564 = vadd.f32 %v554, %v559
        %v565 = vmul.f32 %v561, 0.5
        %v566 = vmul.f32 %v562, 0.5
        %v567 = vmul.f32 %v563, 0.5
        %v568 = vmul.f32 %v564, 0.5
        %v569 = vmul.f32 %v561, 0.70710677
        %v570 = vmul.f32 %v562, 0.70710677
        %v571 = vmul.f32 %v563, 0.70710677
        %v572 = vmul.f32 %v564, 0.70710677
        %v573 = verf.f32.pop %v569
        %v574 = verf.f32.pop %v570
        %v575 = verf.f32.pop %v571
        %v576 = verf.f32.pop %v572
        %v577 = vadd.f32 %v573, 1.0
        %v578 = vadd.f32 %v574, 1.0
        %v579 = vadd.f32 %v575, 1.0
        %v580 = vadd.f32 %v576, 1.0
        %v581 = vmul.f32 %v565, %v577
        %v582 = vmul.f32 %v566, %v578
        %v583 = vmul.f32 %v567, %v579
        %v584 = vmul.f32 %v568, %v580
        %585 = vst [vmem:[%s367] sm:$0xff] %v581
        %586 = vst [vmem:[%s367 + $0x8] sm:$0xff] %v582
        %587 = vst [vmem:[%s367 + $0x10] sm:$0xff] %v583
        %588 = vst [vmem:[%s367 + $0x18] sm:$0xff] %v584
        %v589 = vld [vmem:[#allocation11] sm:$0xff]
        %v590 = vld [vmem:[#allocation11 + $0x8] sm:$0xff]
        %v591 = vld [vmem:[#allocation11 + $0x10] sm:$0xff]
        %v592 = vld [vmem:[#allocation11 + $0x18] sm:$0xff]
        %v593 = vld [vmem:[#allocation11 + $0x20] sm:$0xff]
        %v594 = vld [vmem:[#allocation11 + $0x28] sm:$0xff]
        %v595 = vld [vmem:[#allocation11 + $0x30] sm:$0xff]
        %v596 = vld [vmem:[#allocation11 + $0x38] sm:$0xff]
        %v597 = vld [vmem:[#allocation11 + $0x40] sm:$0xff]
        %v598 = vld [vmem:[#allocation11 + $0x48] sm:$0xff]
        %v599 = vld [vmem:[#allocation11 + $0x50] sm:$0xff]
        %v600 = vld [vmem:[#allocation11 + $0x58] sm:$0xff]
        %v601 = vld [vmem:[#allocation11 + $0x60] sm:$0xff]
        %v602 = vld [vmem:[#allocation11 + $0x68] sm:$0xff]
        %v603 = vld [vmem:[#allocation11 + $0x70] sm:$0xff]
        %v604 = vld [vmem:[#allocation11 + $0x78] sm:$0xff]
        %605 = vmatprep.subr.mxu0 0.0
        %606 = vmatpush1.msra.mxu0 %v589
        %607 = vmatprep.subr.mxu0 0.0
        %608 = vmatpush1.msra.mxu0 %v590
        %609 = vmatprep.subr.mxu0 0.0
        %610 = vmatpush1.msra.mxu0 %v591
        %611 = vmatprep.subr.mxu0 0.0
        %612 = vmatpush1.msra.mxu0 %v592
        %613 = vmatprep.subr.mxu0 0.0
        %614 = vmatpush1.msra.mxu0 %v593
        %615 = vmatprep.subr.mxu0 0.0
        %616 = vmatpush1.msra.mxu0 %v594
        %617 = vmatprep.subr.mxu0 0.0
        %618 = vmatpush1.msra.mxu0 %v595
        %619 = vmatprep.subr.mxu0 0.0
        %620 = vmatpush1.msra.mxu0 %v596
        %621 = vmatprep.subr.mxu0 0.0
        %622 = vmatpush1.msra.mxu0 %v597
        %623 = vmatprep.subr.mxu0 0.0
        %624 = vmatpush1.msra.mxu0 %v598
        %625 = vmatprep.subr.mxu0 0.0
        %626 = vmatpush1.msra.mxu0 %v599
        %627 = vmatprep.subr.mxu0 0.0
        %628 = vmatpush1.msra.mxu0 %v600
        %629 = vmatprep.subr.mxu0 0.0
        %630 = vmatpush1.msra.mxu0 %v601
        %631 = vmatprep.subr.mxu0 0.0
        %632 = vmatpush1.msra.mxu0 %v602
        %633 = vmatprep.subr.mxu0 0.0
        %634 = vmatpush1.msra.mxu0 %v603
        %635 = vmatprep.subr.mxu0 0.0
        %636 = vmatpush1.msra.mxu0 %v604
        %637 = vmatprep.subr.mxu0 0.0
        %638 = vmatpush1.msra.mxu0 0.0
        %639 = vmatprep.subr.mxu0 0.0
        %640 = vmatpush1.msra.mxu0 0.0
        %641 = vmatprep.subr.mxu0 0.0
        %642 = vmatpush1.msra.mxu0 0.0
        %643 = vmatprep.subr.mxu0 0.0
        %644 = vmatpush1.msra.mxu0 0.0
        %645 = vmatprep.subr.mxu0 0.0
        %646 = vmatpush1.msra.mxu0 0.0
        %647 = vmatprep.subr.mxu0 0.0
        %648 = vmatpush1.msra.mxu0 0.0
        %649 = vmatprep.subr.mxu0 0.0
        %650 = vmatpush1.msra.mxu0 0.0
        %651 = vmatprep.subr.mxu0 0.0
        %652 = vmatpush1.msra.mxu0 0.0
        %653 = vmatprep.subr.mxu0 0.0
        %654 = vmatpush1.msra.mxu0 0.0
        %655 = vmatprep.subr.mxu0 0.0
        %656 = vmatpush1.msra.mxu0 0.0
        %657 = vmatprep.subr.mxu0 0.0
        %658 = vmatpush1.msra.mxu0 0.0
        %659 = vmatprep.subr.mxu0 0.0
        %660 = vmatpush1.msra.mxu0 0.0
        %661 = vmatprep.subr.mxu0 0.0
        %662 = vmatpush1.msra.mxu0 0.0
        %663 = vmatprep.subr.mxu0 0.0
        %664 = vmatpush1.msra.mxu0 0.0
        %665 = vmatprep.subr.mxu0 0.0
        %666 = vmatpush1.msra.mxu0 0.0
        %667 = vmatprep.subr.mxu0 0.0
        %668 = vmatpush1.msra.mxu0 0.0
        %669 = vmatprep.mubr.f32.mxu0 0.0
        %670 = vmatmul.mubr.f32.gmra.mrb[0].mxu0 %v581
        %v671 = vpop.f32.mrb[0].mxu0
        %v672 = vadd.f32 0.0, %v671
        %v673 = vpop.f32.mrb[0].mxu0
        %674 = vmatprep.mubr.f32.mxu0 0.0
        %675 = vmatmul.mubr.f32.gmra.mrb[0].mxu0 %v582
        %v676 = vpop.f32.mrb[0].mxu0
        %v677 = vadd.f32 0.0, %v676
        %v678 = vpop.f32.mrb[0].mxu0
        %679 = vmatprep.mubr.f32.mxu0 0.0
        %680 = vmatmul.mubr.f32.gmra.mrb[0].mxu0 %v583
        %v681 = vpop.f32.mrb[0].mxu0
        %v682 = vadd.f32 0.0, %v681
        %v683 = vpop.f32.mrb[0].mxu0
        %684 = vmatprep.mubr.f32.mxu0 0.0
        %685 = vmatmul.mubr.f32.gmra.mrb[0].mxu0 %v584
        %v686 = vpop.f32.mrb[0].mxu0
        %v687 = vadd.f32 0.0, %v686
        %v688 = vpop.f32.mrb[0].mxu0
        %689 = vdwg.mxu0
        %v690 = vpack.c.bf16 %v677, %v672
        %v691 = vpack.c.bf16 %v687, %v682
        %v694 = vunpack.c.l.b16 %v690
        %v695 = vunpack.c.h.b16 %v690
        %v696 = vunpack.c.l.b16 %v691
        %v697 = vunpack.c.h.b16 %v691
        %v698 = vpack.c.b16 %v694, %v694
        %v699 = vpack.c.b16 %v695, %v695
        %v700 = vpack.c.b16 %v696, %v696
        %v701 = vpack.c.b16 %v697, %v697
        %706 = vst [vmem:[%s374] sm:$0xf] %v698
        %707 = vst [vmem:[%s374 + $0x4] sm:$0xf] %v699
        %708 = vst [vmem:[%s374 + $0x8] sm:$0xf] %v700
        %709 = vst [vmem:[%s374 + $0xc] sm:$0xf] %v701
        %s710 = sand.u32 %s170, 1
        %s711 = scalar_lea.sflag [#allocation4], %s710
        %s712 = sand.u32 %s170, 1
        %s713 = smul.addr %s712, 32
        %s714 = scalar_lea.vmem [#allocation13], %s713
        %s715 = sand.u32 %s196, 1
        %s716 = scalar_lea.sflag [#allocation15], %s715
        %s717 = sand.u32 %s196, 1
        %s718 = smul.addr %s717, 16
        %s719 = scalar_lea.vmem [#allocation14], %s718
        // Predicated region
        $region69: #{tpu_custom_call.1} parent=43 // pred_check
          %p720 = pneg %p180
        $region70: #{tpu_custom_call.1} parent=43 // pred_check_branch
          %722 = sbr.rel (%p720) target = $region72
        $region71: #{tpu_custom_call.1} parent=43 // pred_region
          %s723 = smul.u32 4, %s31
          %s725 = ssub.s32 512, 512
          %726 = vsyncadd %s711, %s725
          %s727 = smul.addr %s723, 128
          %s728 = scalar_lea.hbm %s6, %s727
          %s729 = sshll.u32 %s714, 4
          %s730 = int_to_ptr.vmem [resolvable:$true] %s729
          %735 = dma.vmem_to_hbm [thread:$0]  %s730, 512, %s728, %s711, 128, 128, 8
        $region72: #{tpu_custom_call.1} parent=43 // pred_fallthru
          _
        // Predicated region
        $region73: #{tpu_custom_call.1} parent=43 // pred_check
          %p736 = pneg %p206
        $region74: #{tpu_custom_call.1} parent=43 // pred_check_branch
          %738 = sbr.rel (%p736) target = $region76
        $region75: #{tpu_custom_call.1} parent=43 // pred_region
          %s739 = smul.u32 4, %s31
          %s741 = ssub.s32 256, 256
          %742 = vsyncadd %s716, %s741
          %s743 = smul.addr %s739, 64
          %s744 = scalar_lea.hbm %s7, %s743
          %s745 = sshll.u32 %s719, 4
          %s746 = int_to_ptr.vmem [resolvable:$true] %s745
          %751 = dma.vmem_to_hbm [thread:$0]  %s746, 256, %s744, %s716, 64, 64, 4
        $region76: #{tpu_custom_call.1} parent=43 // pred_fallthru
          _
      $region44: #{tpu_custom_call.1} parent=5 // pred_fallthru
        _
      %p752 = scmp.le.s32.totalorder 2, %s26
      // Predicated region
      $region77: #{tpu_custom_call.1} parent=5 // pred_check
        %p753 = pneg %p752
      $region78: #{tpu_custom_call.1} parent=5 // pred_check_branch
        %755 = sbr.rel (%p753) target = $region80
      $region79: #{tpu_custom_call.1} parent=5 // pred_region
        %s756 = ssub.s32 %s26, 2
        // Predicated region
        $region81: #{tpu_custom_call.1} parent=79 // pred_check
          %p757 = pneg %p186
        $region82: #{tpu_custom_call.1} parent=79 // pred_check_branch
          %759 = sbr.rel (%p757) target = $region84
        $region83: #{tpu_custom_call.1} parent=79 // pred_region
          %s760 = sand.u32 %s171, 1
          %s761 = scalar_lea.sflag [#allocation4], %s760
          %s762 = sand.u32 %s171, 1
          %s763 = smul.addr %s762, 32
          %s764 = scalar_lea.vmem [#allocation13], %s763
          %765 = dma.done %s761, 512
        $region84: #{tpu_custom_call.1} parent=79 // pred_fallthru
          _
        // Predicated region
        $region85: #{tpu_custom_call.1} parent=79 // pred_check
          %p766 = pneg %p212
        $region86: #{tpu_custom_call.1} parent=79 // pred_check_branch
          %768 = sbr.rel (%p766) target = $region88
        $region87: #{tpu_custom_call.1} parent=79 // pred_region
          %s769 = sand.u32 %s197, 1
          %s770 = scalar_lea.sflag [#allocation15], %s769
          %s771 = sand.u32 %s197, 1
          %s772 = smul.addr %s771, 16
          %s773 = scalar_lea.vmem [#allocation14], %s772
          %774 = dma.done %s770, 256
        $region88: #{tpu_custom_call.1} parent=79 // pred_fallthru
          _
      $region80: #{tpu_custom_call.1} parent=5 // pred_fallthru
        _
    $region6: #{tpu_custom_call.1} parent=1 // loop_footer
      %s30 = sadd.s32 1, %s26
    $region7: #{tpu_custom_call.1} parent=1 // loop_footer_branch
      %25 = sbr.rel target = $region3
    $region8: #{tpu_custom_call.1} parent=1 // loop_exit
      _
    %775 = vsyncpa [#allocation3], 1
    %s776 = scalar_lea.sflag [#allocation3], 1
    %777 = vsyncpa %s776, 1
    %778 = vsyncpa [#allocation6], 1
    %779 = vsyncpa [#allocation9], 1
    %780 = vsyncpa [#allocation12], 1
    %781 = vsyncpa [#allocation4], 1
    %s782 = scalar_lea.sflag [#allocation4], 1
    %783 = vsyncpa %s782, 1
    %784 = vsyncpa [#allocation15], 1
    %s785 = scalar_lea.sflag [#allocation15], 1
    %786 = vsyncpa %s785, 1

</llo_original>
